<compile_context>
chip_gen: v7x
topology: tpu7x:2x2x1
jax: 0.10.0
libtpu: 0.0.40
codegen_flags: <defaults>
</compile_context>

<pallas_src>
import jax
import jax.numpy as jnp
from jax.experimental import pallas as pl
from jax.experimental.pallas import tpu as pltpu

_VPU_CIN_MAX = 8  # at/below this C_in, an unrolled VPU MAC beats the MXU path


def _out_conv_kernel(x_ref, w_ref, b_ref, o_ref):
    # x_ref: (C_in, TS) spatial tile of one batch element
    # w_ref: (C_out, C_in);  b_ref: (C_out, 1);  o_ref: (C_out, TS)
    c_out, c_in = w_ref.shape
    if c_in <= _VPU_CIN_MAX:
        # Tiny channel mix: unrolled VPU multiply-accumulate. Avoids MXU push +
        # result-FIFO drain latency on a <1%-utilized matmul.
        x = x_ref[...].astype(jnp.float32)
        w = w_ref[...].astype(jnp.float32)
        acc = jnp.broadcast_to(b_ref[...].astype(jnp.float32), o_ref.shape)
        for ci in range(c_in):  # static unroll, c_in <= 8
            acc = acc + w[:, ci:ci + 1] * x[ci:ci + 1, :]
        o_ref[...] = acc.astype(o_ref.dtype)
    else:
        acc = jnp.dot(w_ref[...], x_ref[...], preferred_element_type=jnp.float32)
        o_ref[...] = (acc + b_ref[...].astype(jnp.float32)).astype(o_ref.dtype)


def _vmem_budget():
    """Scoped-VMEM limit (bytes) + minimum grid steps, per TPU generation."""
    cap = 64 * 1024 * 1024  # conservative fallback (v7x-class, 64 MiB / TC)
    try:
        cap = int(getattr(pltpu.get_tpu_info(), "vmem_capacity_bytes", cap))
    except Exception:
        pass
    # Leave headroom for compiler-internal scratch: ~48 MiB on v7x, ~96 MiB on
    # v5e/v6e (128 MiB parts).
    vmem_limit = max(16 * 1024 * 1024, (cap * 3) // 4)
    # <=64 MiB VMEM per core => v7x-class, 2 TensorCores/chip: want more grid
    # steps so both cores get work and DMA still double-buffers.
    min_steps = 8 if cap <= 64 * 1024 * 1024 else 4
    return vmem_limit, min_steps


def _pick_spatial_tile(hw, c_in, c_out, itemsize, vmem_limit, batch, min_steps):
    """Largest 128-multiple tile whose double-buffered x+out traffic fits
    ~35% of the scoped VMEM limit, shrunk until the grid has >= min_steps
    steps for pipelining / megacore sharding. Never below 128 lanes."""
    budget = int(0.35 * vmem_limit)
    per_lane = 2 * (c_in + c_out) * itemsize  # 2x for double-buffering
    ts = max(128, (budget // per_lane) // 128 * 128)
    ts = min(ts, pl.cdiv(hw, 128) * 128)      # never exceed the padded extent

    def steps(t):
        return batch * pl.cdiv(hw, t)

    while ts > 128 and steps(ts) < min_steps:
        ts = max(128, (ts // 2) // 128 * 128)
    return ts


def out_conv(x, weight, bias, *, out_dtype=None):
    """1x1 Conv2d forward (OutConv).

    x: (B, C_in, H, W); weight: (C_out, C_in, 1, 1); bias: (C_out,).
    Returns (B, C_out, H, W) in out_dtype (defaults to x.dtype).
    """
    B, C_in, H, W = x.shape
    C_out = weight.shape[0]
    out_dtype = x.dtype if out_dtype is None else jnp.dtype(out_dtype)
    HW = H * W
    itemsize = max(jnp.dtype(x.dtype).itemsize, jnp.dtype(out_dtype).itemsize)

    vmem_limit, min_steps = _vmem_budget()
    TS = _pick_spatial_tile(HW, C_in, C_out, itemsize, vmem_limit, B, min_steps)
    HW_pad = pl.cdiv(HW, TS) * TS

    x3 = x.reshape(B, C_in, HW)
    if HW_pad != HW:
        # Pad the flattened spatial axis so every tile is full (lane-dense,
        # unmasked stores); the pad is sliced off below.
        x3 = jnp.pad(x3, ((0, 0), (0, 0), (0, HW_pad - HW)))
    w2 = weight.reshape(C_out, C_in)
    b2 = bias.reshape(C_out, 1)

    grid = (B, HW_pad // TS)

    out = pl.pallas_call(
        _out_conv_kernel,
        out_shape=jax.ShapeDtypeStruct((B, C_out, HW_pad), out_dtype),
        grid_spec=pltpu.PrefetchScalarGridSpec(
            num_scalar_prefetch=0,
            grid=grid,
            in_specs=[
                # `None` squeezes the batch dim out of the kernel view.
                pl.BlockSpec((None, C_in, TS), lambda b, s: (b, 0, s)),
                # Weight/bias: constant index_map -> fetched once, VMEM-resident.
                # (pl.Buffered(1) would drop the dead second buffer; the saving
                #  is negligible next to the spatial tiles, so we keep defaults.)
                pl.BlockSpec((C_out, C_in), lambda b, s: (0, 0)),
                pl.BlockSpec((C_out, 1), lambda b, s: (0, 0)),
            ],
            out_specs=pl.BlockSpec((None, C_out, TS), lambda b, s: (b, 0, s)),
        ),
        compiler_params=pltpu.CompilerParams(
            dimension_semantics=("parallel", "parallel"),
            vmem_limit_bytes=int(vmem_limit),
        ),
        cost_estimate=pl.CostEstimate(
            flops=2 * B * HW_pad * C_in * C_out,
            transcendentals=0,
            bytes_accessed=(
                x3.size * jnp.dtype(x.dtype).itemsize
                + (w2.size + b2.size) * jnp.dtype(weight.dtype).itemsize
                + B * C_out * HW_pad * jnp.dtype(out_dtype).itemsize
            ),
        ),
    )(x3, w2, b2)

    if HW_pad != HW:
        out = out[:, :, :HW]
    return out.reshape(B, C_out, H, W)


if __name__ == "__main__":
    key = jax.random.PRNGKey(0)

    def _ref(x, weight, bias):
        C_out, C_in = weight.shape[0], weight.shape[1]
        return jnp.einsum("oc,bchw->bohw", weight.reshape(C_out, C_in), x) + (
            bias.reshape(1, C_out, 1, 1)
        )

    cases = [
        (2, 4, 3, 16, 16),   # main case: HW divides cleanly, VPU path
        (2, 4, 3, 10, 10),   # HW=100 not a 128-multiple -> pad/slice path
        (1, 32, 16, 8, 8),   # larger channel mix -> MXU path
    ]
    for (B, C_in, C_out, H, W) in cases:
        k_x, k_w, k_b, key = jax.random.split(key, 4)
        x = jax.random.normal(k_x, (B, C_in, H, W), dtype=jnp.float32)
        weight = jax.random.normal(k_w, (C_out, C_in, 1, 1), dtype=jnp.float32) * 0.1
        bias = jax.random.normal(k_b, (C_out,), dtype=jnp.float32) * 0.1

        out = jax.block_until_ready(out_conv(x, weight, bias))
        ref = _ref(x, weight, bias)
        assert out.shape == (B, C_out, H, W)
        assert out.dtype == x.dtype
        err = float(jnp.max(jnp.abs(out - ref)))
        assert jnp.allclose(out, ref, atol=1e-5, rtol=1e-5), err

    print("KERNEL_OK")
</pallas_src>

<mosaic_0001>
module attributes {stable_mosaic.version = 11 : i64} {
  func.func @_out_conv_kernel(%arg0: i32, %arg1: i32, %arg2: memref<1x4x128xf32, #tpu.memory_space<vmem>>, %arg3: memref<3x4xf32, #tpu.memory_space<vmem>>, %arg4: memref<3x1xf32, #tpu.memory_space<vmem>>, %arg5: memref<1x3x128xf32, #tpu.memory_space<vmem>>) attributes {dimension_semantics = [#tpu.dimension_semantics<parallel>, #tpu.dimension_semantics<parallel>], iteration_bounds = array<i64: 2, 2>, scalar_prefetch = 0 : i64, scratch_operands = 0 : i64, tpu.core_type = #tpu.core_type<tc>, window_params = [{transform_indices = @transform_0, window_bounds = array<i64: 1, 4, 128>}, {pipeline_mode = #tpu.pipeline_mode<synchronous>, transform_indices = @transform_1, window_bounds = array<i64: 3, 4>}, {pipeline_mode = #tpu.pipeline_mode<synchronous>, transform_indices = @transform_2, window_bounds = array<i64: 3, 1>}, {transform_indices = @transform_3, window_bounds = array<i64: 1, 3, 128>}]} {
    %c0 = arith.constant 0 : index
    %c0_0 = arith.constant 0 : index
    %c0_1 = arith.constant 0 : index
    %0 = vector.load %arg2[%c0, %c0_0, %c0_1] : memref<1x4x128xf32, #tpu.memory_space<vmem>>, vector<1x4x128xf32>
    %1 = vector.shape_cast %0 : vector<1x4x128xf32> to vector<4x128xf32>
    %c0_2 = arith.constant 0 : index
    %c0_3 = arith.constant 0 : index
    %2 = vector.load %arg3[%c0_2, %c0_3] : memref<3x4xf32, #tpu.memory_space<vmem>>, vector<3x4xf32>
    %c0_4 = arith.constant 0 : index
    %c0_5 = arith.constant 0 : index
    %3 = vector.load %arg4[%c0_4, %c0_5] : memref<3x1xf32, #tpu.memory_space<vmem>>, vector<3x1xf32>
    %4 = vector.shape_cast %3 : vector<3x1xf32> to vector<3x1xf32>
    %5 = vector.broadcast %4 : vector<3x1xf32> to vector<3x128xf32>
    %6 = vector.extract_strided_slice %2 {offsets = [0, 0], sizes = [3, 1], strides = [1, 1]} : vector<3x4xf32> to vector<3x1xf32>
    %7 = vector.extract_strided_slice %1 {offsets = [0, 0], sizes = [1, 128], strides = [1, 1]} : vector<4x128xf32> to vector<1x128xf32>
    %8 = vector.broadcast %6 : vector<3x1xf32> to vector<3x128xf32>
    %9 = vector.broadcast %7 : vector<1x128xf32> to vector<3x128xf32>
    %10 = arith.mulf %8, %9 : vector<3x128xf32>
    %11 = arith.addf %5, %10 : vector<3x128xf32>
    %12 = vector.extract_strided_slice %2 {offsets = [0, 1], sizes = [3, 1], strides = [1, 1]} : vector<3x4xf32> to vector<3x1xf32>
    %13 = vector.extract_strided_slice %1 {offsets = [1, 0], sizes = [1, 128], strides = [1, 1]} : vector<4x128xf32> to vector<1x128xf32>
    %14 = vector.broadcast %12 : vector<3x1xf32> to vector<3x128xf32>
    %15 = vector.broadcast %13 : vector<1x128xf32> to vector<3x128xf32>
    %16 = arith.mulf %14, %15 : vector<3x128xf32>
    %17 = arith.addf %11, %16 : vector<3x128xf32>
    %18 = vector.extract_strided_slice %2 {offsets = [0, 2], sizes = [3, 1], strides = [1, 1]} : vector<3x4xf32> to vector<3x1xf32>
    %19 = vector.extract_strided_slice %1 {offsets = [2, 0], sizes = [1, 128], strides = [1, 1]} : vector<4x128xf32> to vector<1x128xf32>
    %20 = vector.broadcast %18 : vector<3x1xf32> to vector<3x128xf32>
    %21 = vector.broadcast %19 : vector<1x128xf32> to vector<3x128xf32>
    %22 = arith.mulf %20, %21 : vector<3x128xf32>
    %23 = arith.addf %17, %22 : vector<3x128xf32>
    %24 = vector.extract_strided_slice %2 {offsets = [0, 3], sizes = [3, 1], strides = [1, 1]} : vector<3x4xf32> to vector<3x1xf32>
    %25 = vector.extract_strided_slice %1 {offsets = [3, 0], sizes = [1, 128], strides = [1, 1]} : vector<4x128xf32> to vector<1x128xf32>
    %26 = vector.broadcast %24 : vector<3x1xf32> to vector<3x128xf32>
    %27 = vector.broadcast %25 : vector<1x128xf32> to vector<3x128xf32>
    %28 = arith.mulf %26, %27 : vector<3x128xf32>
    %29 = arith.addf %23, %28 : vector<3x128xf32>
    %c0_6 = arith.constant 0 : index
    %c0_7 = arith.constant 0 : index
    %c0_8 = arith.constant 0 : index
    %30 = vector.load %arg5[%c0_6, %c0_7, %c0_8] : memref<1x3x128xf32, #tpu.memory_space<vmem>>, vector<1x3x128xf32>
    %31 = vector.shape_cast %30 : vector<1x3x128xf32> to vector<3x128xf32>
    %32 = vector.shape_cast %29 : vector<3x128xf32> to vector<1x3x128xf32>
    tpu.vector_store %arg5[%c0_6, %c0_7, %c0_8], %32 {strides = array<i32>} : memref<1x3x128xf32, #tpu.memory_space<vmem>>, vector<1x3x128xf32>,
    return
  }
  func.func @transform_0(%arg0: i32, %arg1: i32) -> (i32, i32, i32) {
    %c0_i32 = arith.constant 0 : i32
    %c0_i32_0 = arith.constant 0 : i32
    return %arg0, %c0_i32, %arg1 : i32, i32, i32
  }
  func.func @transform_1(%arg0: i32, %arg1: i32) -> (i32, i32) {
    %c0_i32 = arith.constant 0 : i32
    %c0_i32_0 = arith.constant 0 : i32
    %c0_i32_1 = arith.constant 0 : i32
    return %c0_i32, %c0_i32_0 : i32, i32
  }
  func.func @transform_2(%arg0: i32, %arg1: i32) -> (i32, i32) {
    %c0_i32 = arith.constant 0 : i32
    %c0_i32_0 = arith.constant 0 : i32
    %c0_i32_1 = arith.constant 0 : i32
    return %c0_i32, %c0_i32_0 : i32, i32
  }
  func.func @transform_3(%arg0: i32, %arg1: i32) -> (i32, i32, i32) {
    %c0_i32 = arith.constant 0 : i32
    %c0_i32_0 = arith.constant 0 : i32
    return %arg0, %c0_i32, %arg1 : i32, i32, i32
  }
}

</mosaic_0001>

<llo_original>
// kernel: tpu_custom_call.1
$region0: #{tpu_custom_call.1}
  #allocation0 [shape = 'u32[]', space=smem, size = 0x4, offset = 0x4, fixed_abs, tag = 'smem constant byte address 0x4 - core index']
  #allocation1 [shape = 'u32[144,128]{1,0:T(1,128)}', space=vmem, size = 0x12000, scoped, tag = 'internal scratch']
  %s0 = inlined_call_operand.hbm [shape: f32[2,4,256], index: 0, kind: input, shape index: {}]
  %s1 = inlined_call_operand.vmem [shape: f32[3,4], index: 1, kind: input, shape index: {}]
  %s2 = inlined_call_operand.vmem [shape: f32[3,1], index: 2, kind: input, shape index: {}]
  %s3 = inlined_call_operand.vmem [shape: f32[2,3,256], index: 3, kind: output, shape index: {}]
  %s4 = sld [smem:[#allocation0]]
  $region49: #{tpu_custom_call.1} parent=0
    _
  %s6 = ssub.s32 1, %s4
  %s7 = scalar_select 0, %s6, %s4
  $region1: #{tpu_custom_call.1} parent=0
    #allocation2 [shape = 'u8[4096]{0}', space=vmem, size = 0x1000, scoped, tag = 'input window, operand 0']
    #allocation3 [shape = 's32[2]{0}', space=sflag, size = 0x8, scoped, tag = 'scoped memory for tpu_custom_call.1']
    %8 = vsyncpa [#allocation3], 0
    %s9 = scalar_lea.sflag [#allocation3], 1
    %10 = vsyncpa %s9, 0
    loop: start=0, step=1, limit=6
    $region2: #{tpu_custom_call.1} parent=1 // loop_pre_header
      _
    $region3: #{tpu_custom_call.1} parent=1 // loop_header
      %s12 = sphi 0, %s16
      %p13 = scmp.ge.s32.totalorder %s12, 6
      %s19 = sphi 0, %s31
      %s20 = sphi 0, %s27
      %s21 = sphi 0, %s19
      %s22 = sphi 0, %s20
      %s23 = sphi 0, %s21
      %s24 = sphi 0, %s22
      %s36 = sphi 0, %s38
      %s39 = sphi 0, %s36
      %s40 = sphi 0, %s39
      %s56 = sphi 0, %s40
      %s60 = sphi 0, %s60
      %s62 = sphi 0, %s60
      %s63 = sphi 0, %s62
      %s77 = sphi 0, %s63
      %s81 = sphi 0, %s81
      %s83 = sphi 0, %s81
      %s84 = sphi 0, %s83
      %s98 = sphi 0, %s84
      %s106 = sphi 0, %s108
      %s109 = sphi 0, %s106
      %s110 = sphi 0, %s109
      %s126 = sphi 0, %s110
    $region4: #{tpu_custom_call.1} parent=1 // loop_header_branch
      %15 = sbr.rel (%p13) target = $region8
    $region5: #{tpu_custom_call.1} parent=1 // loop_body
      %s17 = ssub.s32 %s12, 1
      %s18 = ssub.s32 %s12, 2
      %s25 = sadd.s32 1, %s20
      %p26 = scmp.ge.s32.totalorder %s25, 2
      %s27 = scalar_select %p26, 0, %s25
      %s28 = sadd.s32 1, %s19
      %s29 = scalar_select %p26, %s28, %s19
      %p30 = scmp.ge.s32.totalorder %s29, 2
      %s31 = scalar_select %p30, 0, %s29
      %s32 = ssub.s32 %s19, %s31
      %s33 = ssub.s32 %s20, %s27
      %s34 = sor.u32 %s32, %s33
      %p35 = scmp.eq.s32.totalorder %s34, 0
      %s37 = sadd.s32 %s36, 1
      %s38 = scalar_select %p35, %s36, %s37
      %p41 = pneg %p35
      %p42 = scmp.eq.s32.totalorder %s12, 3
      %p43 = por %p41, %p42
      %p44 = scmp.ne.s32.totalorder %s36, %s39
      %p45 = scmp.eq.s32.totalorder %s12, 0
      %p46 = por %p44, %p45
      %p47 = scmp.ne.s32.totalorder %s36, %s39
      %p48 = scmp.eq.s32.totalorder %s17, 3
      %p49 = por %p47, %p48
      %p50 = scmp.ne.s32.totalorder %s39, %s40
      %p51 = scmp.eq.s32.totalorder %s17, 0
      %p52 = por %p50, %p51
      %p53 = scmp.ne.s32.totalorder %s39, %s40
      %p54 = scmp.eq.s32.totalorder %s18, 3
      %p55 = por %p53, %p54
      %p57 = scmp.ne.s32.totalorder %s40, %s56
      %p58 = scmp.eq.s32.totalorder %s18, 0
      %p59 = por %p57, %p58
      %s61 = sadd.s32 %s60, 1
      %p64 = scmp.eq.s32.totalorder %s12, 3
      %p65 = scmp.ne.s32.totalorder %s60, %s62
      %p66 = scmp.eq.s32.totalorder %s12, 0
      %p67 = por %p65, %p66
      %p68 = scmp.ne.s32.totalorder %s60, %s62
      %p69 = scmp.eq.s32.totalorder %s17, 3
      %p70 = por %p68, %p69
      %p71 = scmp.ne.s32.totalorder %s62, %s63
      %p72 = scmp.eq.s32.totalorder %s17, 0
      %p73 = por %p71, %p72
      %p74 = scmp.ne.s32.totalorder %s62, %s63
      %p75 = scmp.eq.s32.totalorder %s18, 3
      %p76 = por %p74, %p75
      %p78 = scmp.ne.s32.totalorder %s63, %s77
      %p79 = scmp.eq.s32.totalorder %s18, 0
      %p80 = por %p78, %p79
      %s82 = sadd.s32 %s81, 1
      %p85 = scmp.eq.s32.totalorder %s12, 3
      %p86 = scmp.ne.s32.totalorder %s81, %s83
      %p87 = scmp.eq.s32.totalorder %s12, 0
      %p88 = por %p86, %p87
      %p89 = scmp.ne.s32.totalorder %s81, %s83
      %p90 = scmp.eq.s32.totalorder %s17, 3
      %p91 = por %p89, %p90
      %p92 = scmp.ne.s32.totalorder %s83, %s84
      %p93 = scmp.eq.s32.totalorder %s17, 0
      %p94 = por %p92, %p93
      %p95 = scmp.ne.s32.totalorder %s83, %s84
      %p96 = scmp.eq.s32.totalorder %s18, 3
      %p97 = por %p95, %p96
      %p99 = scmp.ne.s32.totalorder %s84, %s98
      %p100 = scmp.eq.s32.totalorder %s18, 0
      %p101 = por %p99, %p100
      %s102 = ssub.s32 %s19, %s31
      %s103 = ssub.s32 %s20, %s27
      %s104 = sor.u32 %s102, %s103
      %p105 = scmp.eq.s32.totalorder %s104, 0
      %s107 = sadd.s32 %s106, 1
      %s108 = scalar_select %p105, %s106, %s107
      %p111 = pneg %p105
      %p112 = scmp.eq.s32.totalorder %s12, 3
      %p113 = por %p111, %p112
      %p114 = scmp.ne.s32.totalorder %s106, %s109
      %p115 = scmp.eq.s32.totalorder %s12, 0
      %p116 = por %p114, %p115
      %p117 = scmp.ne.s32.totalorder %s106, %s109
      %p118 = scmp.eq.s32.totalorder %s17, 3
      %p119 = por %p117, %p118
      %p120 = scmp.ne.s32.totalorder %s109, %s110
      %p121 = scmp.eq.s32.totalorder %s17, 0
      %p122 = por %p120, %p121
      %p123 = scmp.ne.s32.totalorder %s109, %s110
      %p124 = scmp.eq.s32.totalorder %s18, 3
      %p125 = por %p123, %p124
      %p127 = scmp.ne.s32.totalorder %s110, %s126
      %p128 = scmp.eq.s32.totalorder %s18, 0
      %p129 = por %p127, %p128
      %p130 = scmp.le.s32.totalorder 1, %s12
      %p131 = scmp.lt.s32.totalorder %s12, 5
      %p132 = pnand %p130, %p131
      %p133 = pneg %p132
      // Predicated region
      $region9: #{tpu_custom_call.1} parent=5 // pred_check
        _
      $region10: #{tpu_custom_call.1} parent=5 // pred_check_branch
        %135 = sbr.rel (%p132) target = $region12
      $region11: #{tpu_custom_call.1} parent=5 // pred_region
        %s136 = ssub.s32 %s12, 1
        // Predicated region
        $region13: #{tpu_custom_call.1} parent=11 // pred_check
          %p137 = pneg %p73
        $region14: #{tpu_custom_call.1} parent=11 // pred_check_branch
          %139 = sbr.rel (%p137) target = $region16
        $region15: #{tpu_custom_call.1} parent=11 // pred_region
          _
        $region16: #{tpu_custom_call.1} parent=11 // pred_fallthru
          _
        // Predicated region
        $region17: #{tpu_custom_call.1} parent=11 // pred_check
          %p140 = pneg %p94
        $region18: #{tpu_custom_call.1} parent=11 // pred_check_branch
          %142 = sbr.rel (%p140) target = $region20
        $region19: #{tpu_custom_call.1} parent=11 // pred_region
          _
        $region20: #{tpu_custom_call.1} parent=11 // pred_fallthru
          _
      $region12: #{tpu_custom_call.1} parent=5 // pred_fallthru
        _
      %p143 = scmp.lt.s32.totalorder %s12, 4
      // Predicated region
      $region21: #{tpu_custom_call.1} parent=5 // pred_check
        %p144 = pneg %p143
      $region22: #{tpu_custom_call.1} parent=5 // pred_check_branch
        %146 = sbr.rel (%p144) target = $region24
      $region23: #{tpu_custom_call.1} parent=5 // pred_region
        // Predicated region
        $region25: #{tpu_custom_call.1} parent=23 // pred_check
          %p147 = pneg %p46
        $region26: #{tpu_custom_call.1} parent=23 // pred_check_branch
          %149 = sbr.rel (%p147) target = $region28
        $region27: #{tpu_custom_call.1} parent=23 // pred_region
          %s150 = sand.u32 %s36, 1
          %s151 = scalar_lea.sflag [#allocation3], %s150
          %s152 = sand.u32 %s36, 1
          %s153 = smul.addr %s152, 4
          %s154 = scalar_lea.vmem [#allocation2], %s153
          %s156 = ssub.s32 64, 64
          %157 = vsyncadd %s151, %s156
          %s158 = smul.addr %s19, 2
          %s159 = sadd.s32 %s20, %s158
          %s160 = smul.addr %s159, 64
          %s161 = scalar_lea.hbm %s0, %s160
          %s163 = sshll.u32 %s154, 4
          %s164 = int_to_ptr.vmem [resolvable:$true] %s163
          %166 = dma.hbm_to_vmem [thread:$0]  %s161, 64, %s164, %s151
        $region28: #{tpu_custom_call.1} parent=23 // pred_fallthru
          _
      $region24: #{tpu_custom_call.1} parent=5 // pred_fallthru
        _
      %p167 = scmp.le.s32.totalorder 1, %s12
      %p168 = scmp.lt.s32.totalorder %s12, 5
      %p169 = pnand %p167, %p168
      %p170 = pneg %p169
      // Predicated region
      $region29: #{tpu_custom_call.1} parent=5 // pred_check
        _
      $region30: #{tpu_custom_call.1} parent=5 // pred_check_branch
        %172 = sbr.rel (%p169) target = $region32
      $region31: #{tpu_custom_call.1} parent=5 // pred_region
        %s173 = ssub.s32 %s12, 1
        %s174 = sand.u32 %s39, 1
        %s175 = scalar_lea.sflag [#allocation3], %s174
        %s176 = sand.u32 %s39, 1
        %s177 = smul.addr %s176, 4
        %s178 = scalar_lea.vmem [#allocation2], %s177
        // Predicated region
        $region33: #{tpu_custom_call.1} parent=31 // pred_check
          %p179 = pneg %p52
        $region34: #{tpu_custom_call.1} parent=31 // pred_check_branch
          %181 = sbr.rel (%p179) target = $region36
        $region35: #{tpu_custom_call.1} parent=31 // pred_region
          %182 = dma.done %s175, 64
        $region36: #{tpu_custom_call.1} parent=31 // pred_fallthru
          _
        %s183 = sand.u32 %s39, 1
        %s184 = scalar_lea.sflag [#allocation3], %s183
        %s185 = sand.u32 %s39, 1
        %s186 = smul.addr %s185, 4
        %s187 = scalar_lea.vmem [#allocation2], %s186
        %p188 = pneg %p52
        %p189 = pneg %p49
        %p190 = pneg %p73
        %p191 = pneg %p70
        %p192 = pneg %p94
        %p193 = pneg %p91
        %p194 = pneg %p122
        %p195 = pneg %p119
        %p196 = scmp.lt.s32.totalorder %s21, 1
        %s197 = scalar_select %p196, %s21, 1
        %p198 = scmp.lt.s32.totalorder %s22, 1
        %s199 = scalar_select %p198, %s22, 1
        %s200 = smul.addr %s197, 2
        %s201 = sadd.s32 %s199, %s200
        %s202 = smul.addr %s201, 4
        %s203 = scalar_lea.vmem %s3, %s202
        %p204 = scmp.lt.s32.totalorder %s21, 1
        %s205 = scalar_select %p204, %s21, 1
        %p206 = scmp.lt.s32.totalorder %s22, 1
        %s207 = scalar_select %p206, %s22, 1
        %s208 = smul.addr %s205, 2
        %s209 = sadd.s32 %s207, %s208
        %s210 = smul.addr %s209, 4
        %s211 = scalar_lea.vmem %s3, %s210
        %v212 = vld [vmem:[%s178] sm:$0xf]
        %v213 = vld [vmem:[%s1] sm:$0x7]
        %v214 = vld [vmem:[%s2] sm:$0x7]
        %216 = vset.pattern.permute.xlu0 0
        %217 = vperm.xlu0 %216, %v214
        %v218 = vpop.permute.xlu0 %217
        %221 = vset.pattern.permute.xlu0 0
        %222 = vperm.xlu0 %221, %v213
        %v223 = vpop.permute.xlu0 %222
        %v225 = vlaneseq
        %v226 = vshrl.u32 %v225, 7
        %v227 = vsub.s32 0, %v226
        %v228 = vrot.slane %v212, %v227
        %v229 = vmul.f32 %v223, %v228
        %v230 = vadd.f32 %v218, %v229
        %231 = vset.pattern.permute.xlu0 1
        %232 = vperm.xlu0 %231, %v213
        %v233 = vpop.permute.xlu0 %232
        %v235 = vlaneseq
        %v236 = vshrl.u32 %v235, 7
        %v237 = vsub.s32 1, %v236
        %v238 = vrot.slane %v212, %v237
        %v239 = vmul.f32 %v233, %v238
        %v240 = vadd.f32 %v230, %v239
        %241 = vset.pattern.permute.xlu0 2
        %242 = vperm.xlu0 %241, %v213
        %v243 = vpop.permute.xlu0 %242
        %v245 = vlaneseq
        %v246 = vshrl.u32 %v245, 7
        %v247 = vsub.s32 2, %v246
        %v248 = vrot.slane %v212, %v247
        %v249 = vmul.f32 %v243, %v248
        %v250 = vadd.f32 %v240, %v249
        %251 = vset.pattern.permute.xlu0 3
        %252 = vperm.xlu0 %251, %v213
        %v253 = vpop.permute.xlu0 %252
        %v255 = vlaneseq
        %v256 = vshrl.u32 %v255, 7
        %v257 = vsub.s32 3, %v256
        %v258 = vrot.slane %v212, %v257
        %v259 = vmul.f32 %v253, %v258
        %v260 = vadd.f32 %v250, %v259
        %261 = vst [vmem:[%s211] sm:$0x7] %v260
        %p262 = scmp.lt.s32.totalorder %s21, 1
        %s263 = scalar_select %p262, %s21, 1
        %p264 = scmp.lt.s32.totalorder %s22, 1
        %s265 = scalar_select %p264, %s22, 1
        %s266 = smul.addr %s263, 2
        %s267 = sadd.s32 %s265, %s266
        %s268 = smul.addr %s267, 4
        %s269 = scalar_lea.vmem %s3, %s268
        // Predicated region
        $region37: #{tpu_custom_call.1} parent=31 // pred_check
          %p270 = pneg %p119
        $region38: #{tpu_custom_call.1} parent=31 // pred_check_branch
          %272 = sbr.rel (%p270) target = $region40
        $region39: #{tpu_custom_call.1} parent=31 // pred_region
          _
        $region40: #{tpu_custom_call.1} parent=31 // pred_fallthru
          _
      $region32: #{tpu_custom_call.1} parent=5 // pred_fallthru
        _
      %p273 = scmp.le.s32.totalorder 2, %s12
      // Predicated region
      $region41: #{tpu_custom_call.1} parent=5 // pred_check
        %p274 = pneg %p273
      $region42: #{tpu_custom_call.1} parent=5 // pred_check_branch
        %276 = sbr.rel (%p274) target = $region44
      $region43: #{tpu_custom_call.1} parent=5 // pred_region
        %s277 = ssub.s32 %s12, 2
        // Predicated region
        $region45: #{tpu_custom_call.1} parent=43 // pred_check
          %p278 = pneg %p125
        $region46: #{tpu_custom_call.1} parent=43 // pred_check_branch
          %280 = sbr.rel (%p278) target = $region48
        $region47: #{tpu_custom_call.1} parent=43 // pred_region
          %p281 = scmp.lt.s32.totalorder %s23, 1
          %s282 = scalar_select %p281, %s23, 1
          %p283 = scmp.lt.s32.totalorder %s24, 1
          %s284 = scalar_select %p283, %s24, 1
          %s285 = smul.addr %s282, 2
          %s286 = sadd.s32 %s284, %s285
          %s287 = smul.addr %s286, 4
          %s288 = scalar_lea.vmem %s3, %s287
        $region48: #{tpu_custom_call.1} parent=43 // pred_fallthru
          _
      $region44: #{tpu_custom_call.1} parent=5 // pred_fallthru
        _
    $region6: #{tpu_custom_call.1} parent=1 // loop_footer
      %s16 = sadd.s32 1, %s12
    $region7: #{tpu_custom_call.1} parent=1 // loop_footer_branch
      %11 = sbr.rel target = $region3
    $region8: #{tpu_custom_call.1} parent=1 // loop_exit
      _
    %289 = vsyncpa [#allocation3], 1
    %s290 = scalar_lea.sflag [#allocation3], 1
    %291 = vsyncpa %s290, 1

</llo_original>
